<compile_context>
chip_gen: v7x
topology: tpu7x:2x2x1
jax: 0.10.0
libtpu: 0.0.40
codegen_flags: <defaults>
</compile_context>

<pallas_src>
import jax
import jax.numpy as jnp
from jax.experimental import pallas as pl
from jax.experimental.pallas import tpu as pltpu


def _adv_attn_kernel(x_ref, w1t_ref, b1_ref, w2_ref, o_ref):
    tb, s, d = x_ref.shape

    x3 = x_ref[...]                                  # (TB, S, D)
    # Collapse leading dims so the fc1 matmul sees M = TB*S rows (fills the
    # MXU instead of an M=S sliver). Last dim is untouched; with S a multiple
    # of the 8-row sublane tile this is a pure reinterpretation.
    x2 = x3.reshape(tb * s, d)                       # (TB*S, D)

    # ---- fc1 + relu (MXU + VPU) ------------------------------------------
    h = jnp.dot(x2, w1t_ref[...],
                preferred_element_type=jnp.float32) + b1_ref[...]   # (TB*S, H)
    h = jnp.maximum(h, 0.0)

    # ---- fc2 as VPU multiply + lane reduction (no N=1 matmul) -------------
    # w2_ref is the (1, H) weight row; broadcast over rows, reduce over lanes.
    scores = jnp.sum(h * w2_ref[...], axis=-1, keepdims=True)       # (TB*S, 1)
    # (b2 intentionally omitted: softmax over S is shift-invariant.)
    scores = scores.reshape(tb, s, 1)                                # (TB, S, 1)

    # ---- softmax over the sequence axis, per batch element ----------------
    m = jnp.max(scores, axis=1, keepdims=True)       # (TB, 1, 1)
    e = jnp.exp(scores - m)                          # (TB, S, 1)
    denom = jnp.sum(e, axis=1, keepdims=True)        # (TB, 1, 1)
    # denom is only TB elements, so the exact reciprocal is free; approx=True
    # would loosen precision for no measurable gain at this size.
    attn = e * pl.reciprocal(denom, approx=False)    # (TB, S, 1)

    # ---- weighted input, broadcast attention over the feature axis --------
    o_ref[...] = (x3 * attn).astype(o_ref.dtype)


def _pick_tb(batch, seq, feat, budget_bytes=8 << 20):
    """Pick how many batch elements to process per grid step.

    Budget covers in + out blocks, each double-buffered by the pipeline
    (4 live copies of a (TB, S, D) f32 tile), and keeps TB*S (the MXU M
    dimension) from ballooning far past what one step needs.
    """
    bytes_per_batch_row = 4 * seq * feat * 4          # 4 copies * f32
    tb = max(1, min(batch, budget_bytes // max(bytes_per_batch_row, 1)))
    tb = max(1, min(tb, max(1, 1024 // max(seq, 1))))  # cap MXU M ~ 1024 rows
    while batch % tb:                                  # keep the grid exact
        tb -= 1
    return tb


def adversarial_attention(x, w1, b1, w2, b2=None, *, tb=None):
    """x: (B, S, D) f32; w1: (H, D); b1: (H,); w2: (1, H); b2: (1,) (unused).

    b2 is accepted for interface parity but not used: softmax along the
    sequence axis is invariant to a constant shift of the scores, so the
    forward output is bit-for-bit unaffected by dropping it.
    """
    B, S, D = x.shape
    H = w1.shape[0]

    if tb is None:
        tb = _pick_tb(B, S, D)

    w1t = jnp.asarray(w1).T              # (D, H)  pre-transposed for row-major dot
    b1r = jnp.asarray(b1).reshape(1, H)  # (1, H)
    w2r = jnp.asarray(w2).reshape(1, H)  # (1, H)  row vector for the VPU reduction

    grid = (B // tb,)

    return pl.pallas_call(
        _adv_attn_kernel,
        out_shape=jax.ShapeDtypeStruct((B, S, D), x.dtype),
        grid_spec=pltpu.PrefetchScalarGridSpec(
            num_scalar_prefetch=0,
            grid=grid,
            in_specs=[
                pl.BlockSpec((tb, S, D), lambda i: (i, 0, 0)),
                pl.BlockSpec((D, H), lambda i: (0, 0)),
                pl.BlockSpec((1, H), lambda i: (0, 0)),
                pl.BlockSpec((1, H), lambda i: (0, 0)),
            ],
            out_specs=pl.BlockSpec((tb, S, D), lambda i: (i, 0, 0)),
        ),
        compiler_params=pltpu.CompilerParams(
            dimension_semantics=("parallel",)),
    )(x, w1t, b1r, w2r)


def reference(x, w1, b1, w2, b2):
    h = jnp.maximum(jnp.einsum("bsd,hd->bsh", x, w1) + b1, 0.0)
    s = jnp.einsum("bsh,oh->bso", h, w2) + b2          # (B, S, 1)
    attn = jax.nn.softmax(s, axis=1)
    return x * attn


if __name__ == "__main__":
    B, S, D, H = 2, 8, 32, 32

    key = jax.random.PRNGKey(0)
    kx, k1, k2, k3, k4 = jax.random.split(key, 5)

    x = jax.random.normal(kx, (B, S, D), dtype=jnp.float32)
    # Deterministic "Linear" parameter init (uniform, Torch-like fan-in scaling).
    bound1 = 1.0 / (D ** 0.5)
    w1 = jax.random.uniform(k1, (H, D), jnp.float32, -bound1, bound1)
    b1 = jax.random.uniform(k2, (H,), jnp.float32, -bound1, bound1)
    bound2 = 1.0 / (H ** 0.5)
    w2 = jax.random.uniform(k3, (1, H), jnp.float32, -bound2, bound2)
    b2 = jax.random.uniform(k4, (1,), jnp.float32, -bound2, bound2)

    out = adversarial_attention(x, w1, b1, w2, b2)
    out = jax.block_until_ready(out)

    ref = reference(x, w1, b1, w2, b2)
    assert out.shape == (B, S, D)
    assert jnp.allclose(out, ref, atol=1e-5, rtol=1e-5)

    print("KERNEL_OK")
</pallas_src>

<mosaic_0001>
module attributes {stable_mosaic.version = 11 : i64} {
  func.func @_adv_attn_kernel(%arg0: i32, %arg1: memref<2x8x32xf32, #tpu.memory_space<vmem>>, %arg2: memref<32x32xf32, #tpu.memory_space<vmem>>, %arg3: memref<1x32xf32, #tpu.memory_space<vmem>>, %arg4: memref<1x32xf32, #tpu.memory_space<vmem>>, %arg5: memref<2x8x32xf32, #tpu.memory_space<vmem>>) attributes {dimension_semantics = [#tpu.dimension_semantics<parallel>], iteration_bounds = array<i64: 1>, scalar_prefetch = 0 : i64, scratch_operands = 0 : i64, tpu.core_type = #tpu.core_type<tc>, window_params = [{transform_indices = @transform_0, window_bounds = array<i64: 2, 8, 32>}, {pipeline_mode = #tpu.pipeline_mode<synchronous>, transform_indices = @transform_1, window_bounds = array<i64: 32, 32>}, {pipeline_mode = #tpu.pipeline_mode<synchronous>, transform_indices = @transform_2, window_bounds = array<i64: 1, 32>}, {pipeline_mode = #tpu.pipeline_mode<synchronous>, transform_indices = @transform_3, window_bounds = array<i64: 1, 32>}, {transform_indices = @transform_4, window_bounds = array<i64: 2, 8, 32>}]} {
    %c0 = arith.constant 0 : index
    %c0_0 = arith.constant 0 : index
    %c0_1 = arith.constant 0 : index
    %0 = vector.load %arg1[%c0, %c0_0, %c0_1] : memref<2x8x32xf32, #tpu.memory_space<vmem>>, vector<2x8x32xf32>
    %1 = vector.shape_cast %0 : vector<2x8x32xf32> to vector<16x32xf32>
    %c0_2 = arith.constant 0 : index
    %c0_3 = arith.constant 0 : index
    %2 = vector.load %arg2[%c0_2, %c0_3] : memref<32x32xf32, #tpu.memory_space<vmem>>, vector<32x32xf32>
    %cst = arith.constant dense<0.000000e+00> : vector<16x32xf32>
    %3 = tpu.matmul %1, %2, %cst {dimension_numbers = #tpu.dot_dimension_numbers<[1], [0], [0], [1], [0, 0, 1, 1], [], []>} : vector<16x32xf32>, vector<32x32xf32>, vector<16x32xf32> -> vector<16x32xf32>
    %c0_4 = arith.constant 0 : index
    %c0_5 = arith.constant 0 : index
    %4 = vector.load %arg3[%c0_4, %c0_5] : memref<1x32xf32, #tpu.memory_space<vmem>>, vector<1x32xf32>
    %5 = vector.broadcast %4 : vector<1x32xf32> to vector<16x32xf32>
    %6 = arith.addf %3, %5 : vector<16x32xf32>
    %cst_6 = arith.constant 0.000000e+00 : f32
    %7 = vector.broadcast %cst_6 : f32 to vector<16x32xf32>
    %8 = arith.maximumf %6, %7 : vector<16x32xf32>
    %c0_7 = arith.constant 0 : index
    %c0_8 = arith.constant 0 : index
    %9 = vector.load %arg4[%c0_7, %c0_8] : memref<1x32xf32, #tpu.memory_space<vmem>>, vector<1x32xf32>
    %10 = vector.broadcast %9 : vector<1x32xf32> to vector<16x32xf32>
    %11 = arith.mulf %8, %10 : vector<16x32xf32>
    %cst_9 = arith.constant dense<0.000000e+00> : vector<16xf32>
    %12 = vector.multi_reduction <add>, %11, %cst_9 [1] : vector<16x32xf32> to vector<16xf32>
    %13 = vector.shape_cast %12 : vector<16xf32> to vector<16x1xf32>
    %14 = vector.shape_cast %13 : vector<16x1xf32> to vector<2x8x1xf32>
    %cst_10 = arith.constant dense<0xFF800000> : vector<2x1xf32>
    %15 = vector.multi_reduction <maximumf>, %14, %cst_10 [1] : vector<2x8x1xf32> to vector<2x1xf32>
    %16 = vector.shape_cast %15 : vector<2x1xf32> to vector<2x1x1xf32>
    %17 = vector.broadcast %16 : vector<2x1x1xf32> to vector<2x8x1xf32>
    %18 = arith.subf %14, %17 : vector<2x8x1xf32>
    %19 = math.exp %18 : vector<2x8x1xf32>
    %cst_11 = arith.constant dense<0.000000e+00> : vector<2x1xf32>
    %20 = vector.multi_reduction <add>, %19, %cst_11 [1] : vector<2x8x1xf32> to vector<2x1xf32>
    %21 = vector.shape_cast %20 : vector<2x1xf32> to vector<2x1x1xf32>
    %22 = tpu.reciprocal %21 : vector<2x1x1xf32> -> vector<2x1x1xf32>
    %23 = vector.broadcast %22 : vector<2x1x1xf32> to vector<2x8x1xf32>
    %24 = arith.mulf %19, %23 : vector<2x8x1xf32>
    %25 = vector.broadcast %24 : vector<2x8x1xf32> to vector<2x8x32xf32>
    %26 = arith.mulf %0, %25 : vector<2x8x32xf32>
    %c0_12 = arith.constant 0 : index
    %c0_13 = arith.constant 0 : index
    %c0_14 = arith.constant 0 : index
    %27 = vector.load %arg5[%c0_12, %c0_13, %c0_14] : memref<2x8x32xf32, #tpu.memory_space<vmem>>, vector<2x8x32xf32>
    tpu.vector_store %arg5[%c0_12, %c0_13, %c0_14], %26 {strides = array<i32>} : memref<2x8x32xf32, #tpu.memory_space<vmem>>, vector<2x8x32xf32>,
    return
  }
  func.func @transform_0(%arg0: i32) -> (i32, i32, i32) {
    %c0_i32 = arith.constant 0 : i32
    %c0_i32_0 = arith.constant 0 : i32
    %c0_i32_1 = arith.constant 0 : i32
    return %arg0, %c0_i32, %c0_i32_0 : i32, i32, i32
  }
  func.func @transform_1(%arg0: i32) -> (i32, i32) {
    %c0_i32 = arith.constant 0 : i32
    %c0_i32_0 = arith.constant 0 : i32
    %c0_i32_1 = arith.constant 0 : i32
    return %c0_i32, %c0_i32_0 : i32, i32
  }
  func.func @transform_2(%arg0: i32) -> (i32, i32) {
    %c0_i32 = arith.constant 0 : i32
    %c0_i32_0 = arith.constant 0 : i32
    %c0_i32_1 = arith.constant 0 : i32
    return %c0_i32, %c0_i32_0 : i32, i32
  }
  func.func @transform_3(%arg0: i32) -> (i32, i32) {
    %c0_i32 = arith.constant 0 : i32
    %c0_i32_0 = arith.constant 0 : i32
    %c0_i32_1 = arith.constant 0 : i32
    return %c0_i32, %c0_i32_0 : i32, i32
  }
  func.func @transform_4(%arg0: i32) -> (i32, i32, i32) {
    %c0_i32 = arith.constant 0 : i32
    %c0_i32_0 = arith.constant 0 : i32
    %c0_i32_1 = arith.constant 0 : i32
    return %arg0, %c0_i32, %c0_i32_0 : i32, i32, i32
  }
}

</mosaic_0001>

<llo_original>
// kernel: tpu_custom_call.1
$region0: #{tpu_custom_call.1}
  #allocation0 [shape = 'u32[]', space=smem, size = 0x4, offset = 0x4, fixed_abs, tag = 'smem constant byte address 0x4 - core index']
  #allocation1 [shape = 'u32[144,128]{1,0:T(1,128)}', space=vmem, size = 0x12000, scoped, tag = 'internal scratch']
  %s0 = inlined_call_operand.hbm [shape: f32[2,8,32], index: 0, kind: input, shape index: {}]
  %s1 = inlined_call_operand.hbm [shape: f32[32,32], index: 1, kind: input, shape index: {}]
  %s2 = inlined_call_operand.vmem [shape: f32[1,32], index: 2, kind: input, shape index: {}]
  %s3 = inlined_call_operand.vmem [shape: f32[1,32], index: 3, kind: input, shape index: {}]
  %s4 = inlined_call_operand.hbm [shape: f32[2,8,32], index: 4, kind: output, shape index: {}]
  %s5 = sld [smem:[#allocation0]]
  $region34: #{tpu_custom_call.1} parent=0
    _
  %s7 = ssub.s32 1, %s5
  %s8 = scalar_select 0, %s7, %s5
  $region1: #{tpu_custom_call.1} parent=0
    #allocation2 [shape = 'u8[8192]{0}', space=vmem, size = 0x2000, scoped, tag = 'input window, operand 0, single buffered']
    #allocation3 [shape = 's32[1]{0}', space=sflag, size = 0x4, scoped, tag = 'scoped memory for tpu_custom_call.1']
    #allocation4 [shape = 's32[1]{0}', space=sflag, size = 0x4, scoped, tag = 'scoped memory for tpu_custom_call.1']
    #allocation5 [shape = 'u8[16384]{0}', space=vmem, size = 0x4000, scoped, tag = 'input window, operand 1, single buffered']
    #allocation6 [shape = 's32[1]{0}', space=sflag, size = 0x4, scoped, tag = 'scoped memory for tpu_custom_call.1']
    #allocation7 [shape = 'u8[8192]{0}', space=vmem, size = 0x2000, scoped, tag = 'output window, operand 0, single buffered']
    %9 = vsyncpa [#allocation3], 0
    %10 = vsyncpa [#allocation6], 0
    %11 = vsyncpa [#allocation4], 0
    // Predicated region
    $region2: #{tpu_custom_call.1} parent=1 // pred_check
      _
    $region3: #{tpu_custom_call.1} parent=1 // pred_check_branch
      %13 = sbr.rel (0) target = $region5
    $region4: #{tpu_custom_call.1} parent=1 // pred_region
      %s15 = ssub.s32 256, 256
      %16 = vsyncadd [#allocation3], %s15
      %s17 = sshll.u32 [#allocation2], 4
      %s18 = int_to_ptr.vmem [resolvable:$true] %s17
      %23 = dma.hbm_to_vmem [thread:$0]  %s0, 256, %s18, [#allocation3], 128, 128, 8
    $region5: #{tpu_custom_call.1} parent=1 // pred_fallthru
      _
    // Predicated region
    $region6: #{tpu_custom_call.1} parent=1 // pred_check
      _
    $region7: #{tpu_custom_call.1} parent=1 // pred_check_branch
      %25 = sbr.rel (0) target = $region9
    $region8: #{tpu_custom_call.1} parent=1 // pred_region
      %s27 = ssub.s32 512, 512
      %28 = vsyncadd [#allocation6], %s27
      %s29 = sshll.u32 [#allocation5], 4
      %s30 = int_to_ptr.vmem [resolvable:$true] %s29
      %35 = dma.hbm_to_vmem [thread:$0]  %s1, 512, %s30, [#allocation6], 128, 128, 8
    $region9: #{tpu_custom_call.1} parent=1 // pred_fallthru
      _
    // Predicated region
    $region10: #{tpu_custom_call.1} parent=1 // pred_check
      _
    $region11: #{tpu_custom_call.1} parent=1 // pred_check_branch
      %37 = sbr.rel (0) target = $region13
    $region12: #{tpu_custom_call.1} parent=1 // pred_region
      _
    $region13: #{tpu_custom_call.1} parent=1 // pred_fallthru
      _
    // Predicated region
    $region14: #{tpu_custom_call.1} parent=1 // pred_check
      _
    $region15: #{tpu_custom_call.1} parent=1 // pred_check_branch
      %39 = sbr.rel (0) target = $region17
    $region16: #{tpu_custom_call.1} parent=1 // pred_region
      _
    $region17: #{tpu_custom_call.1} parent=1 // pred_fallthru
      _
    // Predicated region
    $region18: #{tpu_custom_call.1} parent=1 // pred_check
      _
    $region19: #{tpu_custom_call.1} parent=1 // pred_check_branch
      %41 = sbr.rel (0) target = $region21
    $region20: #{tpu_custom_call.1} parent=1 // pred_region
      %42 = dma.done [#allocation3], 256
    $region21: #{tpu_custom_call.1} parent=1 // pred_fallthru
      _
    // Predicated region
    $region22: #{tpu_custom_call.1} parent=1 // pred_check
      _
    $region23: #{tpu_custom_call.1} parent=1 // pred_check_branch
      %44 = sbr.rel (0) target = $region25
    $region24: #{tpu_custom_call.1} parent=1 // pred_region
      %45 = dma.done [#allocation6], 512
    $region25: #{tpu_custom_call.1} parent=1 // pred_fallthru
      _
    %v46 = vld [vmem:[#allocation2] sm:$0xff]
    %v47 = vld [vmem:[#allocation2 + $0x8] sm:$0xff]
    %v48 = vld [vmem:[#allocation5] sm:$0xff]
    %v49 = vld [vmem:[#allocation5 + $0x8] sm:$0xff]
    %v50 = vld [vmem:[#allocation5 + $0x10] sm:$0xff]
    %v51 = vld [vmem:[#allocation5 + $0x18] sm:$0xff]
    %v52 = vld [vmem:[%s2] sm:$0x1]
    %v54 = vlaneseq
    %v55 = vshrl.u32 %v54, 7
    %v56 = vsub.s32 0, %v55
    %v57 = vrot.slane %v52, %v56
    %vm59 = vcmask 261120
    %v61 = vsel %vm59, %v46, 0
    %v64 = vsel %vm59, %v47, 0
    %66 = vmatprep.subr.mxu0 0.0
    %67 = vmatpush1.msra.mxu0 %v48
    %68 = vmatprep.subr.mxu0 0.0
    %69 = vmatpush1.msra.mxu0 %v49
    %70 = vmatprep.subr.mxu0 0.0
    %71 = vmatpush1.msra.mxu0 %v50
    %72 = vmatprep.subr.mxu0 0.0
    %73 = vmatpush1.msra.mxu0 %v51
    %74 = vmatprep.subr.mxu0 0.0
    %75 = vmatpush1.msra.mxu0 0.0
    %76 = vmatprep.subr.mxu0 0.0
    %77 = vmatpush1.msra.mxu0 0.0
    %78 = vmatprep.subr.mxu0 0.0
    %79 = vmatpush1.msra.mxu0 0.0
    %80 = vmatprep.subr.mxu0 0.0
    %81 = vmatpush1.msra.mxu0 0.0
    %82 = vmatprep.subr.mxu0 0.0
    %83 = vmatpush1.msra.mxu0 0.0
    %84 = vmatprep.subr.mxu0 0.0
    %85 = vmatpush1.msra.mxu0 0.0
    %86 = vmatprep.subr.mxu0 0.0
    %87 = vmatpush1.msra.mxu0 0.0
    %88 = vmatprep.subr.mxu0 0.0
    %89 = vmatpush1.msra.mxu0 0.0
    %90 = vmatprep.subr.mxu0 0.0
    %91 = vmatpush1.msra.mxu0 0.0
    %92 = vmatprep.subr.mxu0 0.0
    %93 = vmatpush1.msra.mxu0 0.0
    %94 = vmatprep.subr.mxu0 0.0
    %95 = vmatpush1.msra.mxu0 0.0
    %96 = vmatprep.subr.mxu0 0.0
    %97 = vmatpush1.msra.mxu0 0.0
    %98 = vmatprep.subr.mxu0 0.0
    %99 = vmatpush1.msra.mxu0 0.0
    %100 = vmatprep.subr.mxu0 0.0
    %101 = vmatpush1.msra.mxu0 0.0
    %102 = vmatprep.subr.mxu0 0.0
    %103 = vmatpush1.msra.mxu0 0.0
    %104 = vmatprep.subr.mxu0 0.0
    %105 = vmatpush1.msra.mxu0 0.0
    %106 = vmatprep.subr.mxu0 0.0
    %107 = vmatpush1.msra.mxu0 0.0
    %108 = vmatprep.subr.mxu0 0.0
    %109 = vmatpush1.msra.mxu0 0.0
    %110 = vmatprep.subr.mxu0 0.0
    %111 = vmatpush1.msra.mxu0 0.0
    %112 = vmatprep.subr.mxu0 0.0
    %113 = vmatpush1.msra.mxu0 0.0
    %114 = vmatprep.subr.mxu0 0.0
    %115 = vmatpush1.msra.mxu0 0.0
    %116 = vmatprep.subr.mxu0 0.0
    %117 = vmatpush1.msra.mxu0 0.0
    %118 = vmatprep.subr.mxu0 0.0
    %119 = vmatpush1.msra.mxu0 0.0
    %120 = vmatprep.subr.mxu0 0.0
    %121 = vmatpush1.msra.mxu0 0.0
    %122 = vmatprep.subr.mxu0 0.0
    %123 = vmatpush1.msra.mxu0 0.0
    %124 = vmatprep.subr.mxu0 0.0
    %125 = vmatpush1.msra.mxu0 0.0
    %126 = vmatprep.subr.mxu0 0.0
    %127 = vmatpush1.msra.mxu0 0.0
    %128 = vmatprep.subr.mxu0 0.0
    %129 = vmatpush1.msra.mxu0 0.0
    %130 = vmatprep.mubr.f32.mxu0 0.0
    %131 = vmatmul.mubr.f32.gmra.mrb[0].mxu0 %v61
    %v132 = vpop.f32.mrb[0].mxu0
    %v133 = vadd.f32 %v57, %v132
    %v134 = vpop.f32.mrb[0].mxu0
    %135 = vmatprep.mubr.f32.mxu0 0.0
    %136 = vmatmul.mubr.f32.gmra.mrb[0].mxu0 %v64
    %v137 = vpop.f32.mrb[0].mxu0
    %v138 = vadd.f32 %v57, %v137
    %v139 = vpop.f32.mrb[0].mxu0
    %140 = vdwg.mxu0
    %v141 = vmax.f32 %v133, 0.0
    %v142 = vmax.f32 %v138, 0.0
    %v143 = vld [vmem:[%s3] sm:$0x1]
    %v145 = vlaneseq
    %v146 = vshrl.u32 %v145, 7
    %v147 = vsub.s32 0, %v146
    %v148 = vrot.slane %v143, %v147
    %v150 = vmul.f32 %v141, %v148
    %v151 = vmul.f32 %v142, %v148
    %v152 = vsel %vm59, %v150, 0.0
    %153 = vadd.xlane.f32.xlu0 %v152
    %v154 = vpop.xlane.xlu0 %153
    %v155 = vsel %vm59, %v151, 0.0
    %156 = vadd.xlane.f32.xlu0 %v155
    %v157 = vpop.xlane.xlu0 %156
    %v158 = vrot.slane %v154, 4
    %v159 = vmax.f32 %v154, %v158
    %v160 = vrot.slane %v159, 2
    %v161 = vmax.f32 %v159, %v160
    %v162 = vrot.slane %v161, 1
    %v163 = vmax.f32 %v161, %v162
    %v164 = vrot.slane %v157, 4
    %v165 = vmax.f32 %v157, %v164
    %v166 = vrot.slane %v165, 2
    %v167 = vmax.f32 %v165, %v166
    %v168 = vrot.slane %v167, 1
    %v169 = vmax.f32 %v167, %v168
    %v170 = vsub.f32 %v154, %v163
    %v171 = vsub.f32 %v157, %v169
    %v172 = vmul.f32 %v170, 1.442695
    %v173 = vpow.pop %v172
    %v174 = vmul.f32 %v171, 1.442695
    %v175 = vpow.pop %v174
    %v176 = vrot.slane %v173, 4
    %v177 = vadd.f32 %v173, %v176
    %v178 = vrot.slane %v177, 2
    %v179 = vadd.f32 %v177, %v178
    %v180 = vrot.slane %v179, 1
    %v181 = vadd.f32 %v179, %v180
    %v182 = vrot.slane %v175, 4
    %v183 = vadd.f32 %v175, %v182
    %v184 = vrot.slane %v183, 2
    %v185 = vadd.f32 %v183, %v184
    %v186 = vrot.slane %v185, 1
    %v187 = vadd.f32 %v185, %v186
    %v188 = vrcp.pop %v181
    %v189 = vrcp.pop %v187
    %v190 = vmul.f32 %v173, %v188
    %v191 = vmul.f32 %v175, %v189
    %v192 = vmul.f32 %v46, %v190
    %v193 = vmul.f32 %v47, %v191
    %194 = vst.msk [vmem:[#allocation7] sm:$0xff] %vm59, %v192
    %195 = vst.msk [vmem:[#allocation7 + $0x8] sm:$0xff] %vm59, %v193
    // Predicated region
    $region26: #{tpu_custom_call.1} parent=1 // pred_check
      _
    $region27: #{tpu_custom_call.1} parent=1 // pred_check_branch
      %197 = sbr.rel (0) target = $region29
    $region28: #{tpu_custom_call.1} parent=1 // pred_region
      %s199 = ssub.s32 256, 256
      %200 = vsyncadd [#allocation4], %s199
      %s201 = sshll.u32 [#allocation7], 4
      %s202 = int_to_ptr.vmem [resolvable:$true] %s201
      %207 = dma.vmem_to_hbm [thread:$0]  %s202, 256, %s4, [#allocation4], 128, 128, 8
    $region29: #{tpu_custom_call.1} parent=1 // pred_fallthru
      _
    // Predicated region
    $region30: #{tpu_custom_call.1} parent=1 // pred_check
      _
    $region31: #{tpu_custom_call.1} parent=1 // pred_check_branch
      %209 = sbr.rel (0) target = $region33
    $region32: #{tpu_custom_call.1} parent=1 // pred_region
      %210 = dma.done [#allocation4], 256
    $region33: #{tpu_custom_call.1} parent=1 // pred_fallthru
      _
    %211 = vsyncpa [#allocation3], 1
    %212 = vsyncpa [#allocation6], 1
    %213 = vsyncpa [#allocation4], 1

</llo_original>
